<compile_context>
chip_gen: v6e
topology: v6e:2x2x1
jax: 0.10.0
libtpu: 0.0.40
codegen_flags: <defaults>
</compile_context>

<pallas_src>
import jax
import jax.numpy as jnp
from jax.experimental import pallas as pl
from jax.experimental.pallas import tpu as pltpu


def simple_fc_kernel(x_ref, w1_ref, b1_ref, w2_ref, b2_ref, o_ref):
    # x: (TM, 2304) f32, w1: (2304, 128) bf16, b1: (1, 128) f32,
    # w2: (128, 128) bf16 (lane-padded), b2: (1, 128) f32 (pad cols = -1e30),
    # o: (TM, 128) f32

    # Cast x to bf16 in-kernel (VPU, hidden under the next tile's DMA);
    # Linear(2304 -> 128) with f32 accumulation on the MXU.
    x_bf = x_ref[...].astype(jnp.bfloat16)
    h = jnp.dot(x_bf, w1_ref[...],
                preferred_element_type=jnp.float32) + b1_ref[...]

    # Linear(128 -> 7), lane-padded to 128 output columns; bf16 operands,
    # f32 accumulation. Pad columns get logit -1e30 via the padded bias.
    logits = jnp.dot(h.astype(jnp.bfloat16), w2_ref[...],
                     preferred_element_type=jnp.float32) + b2_ref[...]

    # softmax over dim=1 (numerically stable, exact divide so rows sum to 1;
    # padded columns contribute exp(-1e30 - m) == 0 to the denominator).
    m = jnp.max(logits, axis=1, keepdims=True)
    e = jnp.exp(logits - m)
    denom = jnp.sum(e, axis=1, keepdims=True)
    o_ref[...] = (e / denom).astype(o_ref.dtype)


def _round_up(x, m):
    return ((x + m - 1) // m) * m


def _choose_tm(batch, tm_max):
    """Batch tile: no padding of x, >=2 grid steps for mid/large batches."""
    if batch <= 256:
        # Single block covering the whole (small) batch. Block dim == full
        # array dim, so any batch size is legal and nothing needs padding.
        return batch
    # Cap so the grid has at least 2 steps (v7x megacore split) and keep the
    # tile a multiple of 8 so a ragged final block is legal.
    half = _round_up(pl.cdiv(batch, 2), 8)
    return max(8, min(tm_max, half))


def simple_fc_forward(x_nchw, w1, b1, w2, b2, *, tm=1024):
    """x_nchw: (B, 1, 48, 48) float32 -> (B, 7) softmax probabilities."""
    B = x_nchw.shape[0]
    x2d = x_nchw.reshape(B, -1)          # (B, 2304), same as torch .view(B, -1)

    in_feat = x2d.shape[1]
    hid = w1.shape[1]
    ncls = w2.shape[1]

    # Lane-dense output: pad the class dim to 128 columns. Zero weights and a
    # large finite negative bias (-1e30, not -inf) so padded classes contribute
    # exactly 0 to the softmax denominator.
    ncls_p = max(128, _round_up(ncls, 128))
    w2_p = jnp.zeros((hid, ncls_p), jnp.float32).at[:, :ncls].set(w2)
    b2_p = jnp.full((1, ncls_p), -1e30, jnp.float32).at[:, :ncls].set(b2)

    # Parameters are tiny and resident in VMEM; cast matmul operands to bf16
    # once here (x itself stays f32 and is cast in-kernel).
    w1_bf = w1.astype(jnp.bfloat16)
    w2_bf = w2_p.astype(jnp.bfloat16)

    tm = _choose_tm(B, tm)
    grid = (pl.cdiv(B, tm),)             # ragged final block handled by Pallas

    out = pl.pallas_call(
        simple_fc_kernel,
        out_shape=jax.ShapeDtypeStruct((B, ncls_p), jnp.float32),
        grid=grid,
        in_specs=[
            pl.BlockSpec((tm, in_feat), lambda i: (i, 0)),     # x: tiled over batch (f32)
            pl.BlockSpec((in_feat, hid), lambda i: (0, 0)),    # w1: resident (bf16)
            pl.BlockSpec((1, hid), lambda i: (0, 0)),          # b1: resident
            pl.BlockSpec((hid, ncls_p), lambda i: (0, 0)),     # w2: resident (bf16)
            pl.BlockSpec((1, ncls_p), lambda i: (0, 0)),       # b2: resident
        ],
        out_specs=pl.BlockSpec((tm, ncls_p), lambda i: (i, 0)),
        compiler_params=pltpu.CompilerParams(
            dimension_semantics=("parallel",),
            # tm=1024 f32 x tile = 9.4 MB, double-buffered ~19 MB: above v5e's
            # 16 MiB default scoped limit, comfortably under 40 MiB everywhere
            # (v7x physical VMEM is 64 MiB per TC).
            vmem_limit_bytes=40 * 1024 * 1024,
        ),
    )(x2d, w1_bf, b1, w2_bf, b2_p)

    # Tiny slice (B,128) -> (B,7) outside the kernel.
    return out[:, :ncls]


def init_params(key):
    """Deterministic init mimicking torch.nn.Linear (U(-1/sqrt(fan_in), +1/sqrt(fan_in)))."""
    k1, k2, k3, k4 = jax.random.split(key, 4)
    in1, out1 = 48 * 48, 128
    in2, out2 = 128, 7
    bound1 = 1.0 / jnp.sqrt(jnp.float32(in1))
    bound2 = 1.0 / jnp.sqrt(jnp.float32(in2))
    # stored transposed: (in_features, out_features)
    w1 = jax.random.uniform(k1, (in1, out1), jnp.float32, -bound1, bound1)
    b1 = jax.random.uniform(k2, (1, out1), jnp.float32, -bound1, bound1)
    w2 = jax.random.uniform(k3, (in2, out2), jnp.float32, -bound2, bound2)
    b2 = jax.random.uniform(k4, (1, out2), jnp.float32, -bound2, bound2)
    return w1, b1, w2, b2


if __name__ == "__main__":
    key = jax.random.PRNGKey(0)
    kx, kp = jax.random.split(key)

    B = 2
    x = jax.random.normal(kx, (B, 1, 48, 48), jnp.float32)  # NCHW, like torch
    w1, b1, w2, b2 = init_params(kp)

    fwd = jax.jit(simple_fc_forward)
    out = fwd(x, w1, b1, w2, b2)
    out = jax.block_until_ready(out)

    # pure-JAX reference applying the same bf16 operand casts (f32 accumulation),
    # so the only differences vs the kernel are accumulation order.
    x2d = x.reshape(B, -1)
    h_ref = jnp.dot(x2d.astype(jnp.bfloat16), w1.astype(jnp.bfloat16),
                    preferred_element_type=jnp.float32) + b1
    logits_ref = jnp.dot(h_ref.astype(jnp.bfloat16), w2.astype(jnp.bfloat16),
                         preferred_element_type=jnp.float32) + b2
    ref = jax.nn.softmax(logits_ref, axis=1)

    assert out.shape == (B, 7)
    assert jnp.allclose(out, ref, atol=2e-3, rtol=2e-3)
    assert jnp.allclose(jnp.sum(out, axis=1), 1.0, atol=1e-3)

    print("KERNEL_OK")
</pallas_src>

<mosaic_0001>
module attributes {stable_mosaic.version = 11 : i64} {
  func.func @simple_fc_kernel(%arg0: i32, %arg1: memref<2x2304xf32, #tpu.memory_space<vmem>>, %arg2: memref<2304x128xbf16, #tpu.memory_space<vmem>>, %arg3: memref<1x128xf32, #tpu.memory_space<vmem>>, %arg4: memref<128x128xbf16, #tpu.memory_space<vmem>>, %arg5: memref<1x128xf32, #tpu.memory_space<vmem>>, %arg6: memref<2x128xf32, #tpu.memory_space<vmem>>) attributes {dimension_semantics = [#tpu.dimension_semantics<parallel>], iteration_bounds = array<i64: 1>, scalar_prefetch = 0 : i64, scratch_operands = 0 : i64, tpu.core_type = #tpu.core_type<tc>, window_params = [{transform_indices = @transform_0, window_bounds = array<i64: 2, 2304>}, {pipeline_mode = #tpu.pipeline_mode<synchronous>, transform_indices = @transform_1, window_bounds = array<i64: 2304, 128>}, {pipeline_mode = #tpu.pipeline_mode<synchronous>, transform_indices = @transform_2, window_bounds = array<i64: 1, 128>}, {pipeline_mode = #tpu.pipeline_mode<synchronous>, transform_indices = @transform_3, window_bounds = array<i64: 128, 128>}, {pipeline_mode = #tpu.pipeline_mode<synchronous>, transform_indices = @transform_4, window_bounds = array<i64: 1, 128>}, {transform_indices = @transform_5, window_bounds = array<i64: 2, 128>}]} {
    %c0 = arith.constant 0 : index
    %c0_0 = arith.constant 0 : index
    %0 = vector.load %arg1[%c0, %c0_0] : memref<2x2304xf32, #tpu.memory_space<vmem>>, vector<2x2304xf32>
    %1 = arith.truncf %0 : vector<2x2304xf32> to vector<2x2304xbf16>
    %c0_1 = arith.constant 0 : index
    %c0_2 = arith.constant 0 : index
    %2 = vector.load %arg2[%c0_1, %c0_2] : memref<2304x128xbf16, #tpu.memory_space<vmem>>, vector<2304x128xbf16>
    %cst = arith.constant dense<0.000000e+00> : vector<2x128xf32>
    %3 = tpu.matmul %1, %2, %cst {dimension_numbers = #tpu.dot_dimension_numbers<[1], [0], [0], [1], [0, 0, 1, 1], [], []>} : vector<2x2304xbf16>, vector<2304x128xbf16>, vector<2x128xf32> -> vector<2x128xf32>
    %c0_3 = arith.constant 0 : index
    %c0_4 = arith.constant 0 : index
    %4 = vector.load %arg3[%c0_3, %c0_4] : memref<1x128xf32, #tpu.memory_space<vmem>>, vector<1x128xf32>
    %5 = vector.broadcast %4 : vector<1x128xf32> to vector<2x128xf32>
    %6 = arith.addf %3, %5 : vector<2x128xf32>
    %7 = arith.truncf %6 : vector<2x128xf32> to vector<2x128xbf16>
    %c0_5 = arith.constant 0 : index
    %c0_6 = arith.constant 0 : index
    %8 = vector.load %arg4[%c0_5, %c0_6] : memref<128x128xbf16, #tpu.memory_space<vmem>>, vector<128x128xbf16>
    %cst_7 = arith.constant dense<0.000000e+00> : vector<2x128xf32>
    %9 = tpu.matmul %7, %8, %cst_7 {dimension_numbers = #tpu.dot_dimension_numbers<[1], [0], [0], [1], [0, 0, 1, 1], [], []>} : vector<2x128xbf16>, vector<128x128xbf16>, vector<2x128xf32> -> vector<2x128xf32>
    %c0_8 = arith.constant 0 : index
    %c0_9 = arith.constant 0 : index
    %10 = vector.load %arg5[%c0_8, %c0_9] : memref<1x128xf32, #tpu.memory_space<vmem>>, vector<1x128xf32>
    %11 = vector.broadcast %10 : vector<1x128xf32> to vector<2x128xf32>
    %12 = arith.addf %9, %11 : vector<2x128xf32>
    %cst_10 = arith.constant dense<0xFF800000> : vector<2xf32>
    %13 = vector.multi_reduction <maximumf>, %12, %cst_10 [1] : vector<2x128xf32> to vector<2xf32>
    %14 = vector.shape_cast %13 : vector<2xf32> to vector<2x1xf32>
    %15 = vector.broadcast %14 : vector<2x1xf32> to vector<2x128xf32>
    %16 = arith.subf %12, %15 : vector<2x128xf32>
    %17 = math.exp %16 : vector<2x128xf32>
    %cst_11 = arith.constant dense<0.000000e+00> : vector<2xf32>
    %18 = vector.multi_reduction <add>, %17, %cst_11 [1] : vector<2x128xf32> to vector<2xf32>
    %19 = vector.shape_cast %18 : vector<2xf32> to vector<2x1xf32>
    %20 = vector.broadcast %19 : vector<2x1xf32> to vector<2x128xf32>
    %21 = arith.divf %17, %20 : vector<2x128xf32>
    %c0_12 = arith.constant 0 : index
    %c0_13 = arith.constant 0 : index
    %22 = vector.load %arg6[%c0_12, %c0_13] : memref<2x128xf32, #tpu.memory_space<vmem>>, vector<2x128xf32>
    tpu.vector_store %arg6[%c0_12, %c0_13], %21 {strides = array<i32>} : memref<2x128xf32, #tpu.memory_space<vmem>>, vector<2x128xf32>,
    return
  }
  func.func @transform_0(%arg0: i32) -> (i32, i32) {
    %c0_i32 = arith.constant 0 : i32
    %c0_i32_0 = arith.constant 0 : i32
    return %arg0, %c0_i32 : i32, i32
  }
  func.func @transform_1(%arg0: i32) -> (i32, i32) {
    %c0_i32 = arith.constant 0 : i32
    %c0_i32_0 = arith.constant 0 : i32
    %c0_i32_1 = arith.constant 0 : i32
    return %c0_i32, %c0_i32_0 : i32, i32
  }
  func.func @transform_2(%arg0: i32) -> (i32, i32) {
    %c0_i32 = arith.constant 0 : i32
    %c0_i32_0 = arith.constant 0 : i32
    %c0_i32_1 = arith.constant 0 : i32
    return %c0_i32, %c0_i32_0 : i32, i32
  }
  func.func @transform_3(%arg0: i32) -> (i32, i32) {
    %c0_i32 = arith.constant 0 : i32
    %c0_i32_0 = arith.constant 0 : i32
    %c0_i32_1 = arith.constant 0 : i32
    return %c0_i32, %c0_i32_0 : i32, i32
  }
  func.func @transform_4(%arg0: i32) -> (i32, i32) {
    %c0_i32 = arith.constant 0 : i32
    %c0_i32_0 = arith.constant 0 : i32
    %c0_i32_1 = arith.constant 0 : i32
    return %c0_i32, %c0_i32_0 : i32, i32
  }
  func.func @transform_5(%arg0: i32) -> (i32, i32) {
    %c0_i32 = arith.constant 0 : i32
    %c0_i32_0 = arith.constant 0 : i32
    return %arg0, %c0_i32 : i32, i32
  }
}

</mosaic_0001>

<llo_original>
// kernel: simple_fc_forward.1
$region0: #{simple_fc_forward.1}
  #allocation0 [shape = 'u32[]', space=smem, size = 0x4, offset = 0x4, fixed_abs, tag = 'smem constant byte address 0x4 - core index']
  #allocation1 [shape = 'u32[144,128]{1,0:T(1,128)}', space=vmem, size = 0x12000, scoped, tag = 'internal scratch']
  %s0 = inlined_call_operand.vmem [shape: f32[2,2304], index: 0, kind: input, shape index: {}]
  %s1 = inlined_call_operand.vmem [shape: bf16[2304,128], index: 1, kind: input, shape index: {}]
  %s2 = inlined_call_operand.vmem [shape: f32[1,128], index: 2, kind: input, shape index: {}]
  %s3 = inlined_call_operand.vmem [shape: bf16[128,128], index: 3, kind: input, shape index: {}]
  %s4 = inlined_call_operand.vmem [shape: f32[1,128], index: 4, kind: input, shape index: {}]
  %s5 = inlined_call_operand.hbm [shape: f32[2,128], index: 5, kind: output, shape index: {}]
  %s6 = sld [smem:[#allocation0]]
  $region30: #{simple_fc_forward.1} parent=0
    _
  %s8 = ssub.s32 1, %s6
  %s9 = scalar_select 0, %s8, %s6
  $region1: #{simple_fc_forward.1} parent=0
    #allocation2 [shape = 'u8[1024]{0}', space=vmem, size = 0x400, scoped, tag = 'output window, operand 0, single buffered']
    #allocation3 [shape = 's32[1]{0}', space=sflag, size = 0x4, scoped, tag = 'scoped memory for simple_fc_forward.1']
    %10 = vsyncpa [#allocation3], 0
    // Predicated region
    $region2: #{simple_fc_forward.1} parent=1 // pred_check
      _
    $region3: #{simple_fc_forward.1} parent=1 // pred_check_branch
      %12 = sbr.rel (0) target = $region5
    $region4: #{simple_fc_forward.1} parent=1 // pred_region
      _
    $region5: #{simple_fc_forward.1} parent=1 // pred_fallthru
      _
    // Predicated region
    $region6: #{simple_fc_forward.1} parent=1 // pred_check
      _
    $region7: #{simple_fc_forward.1} parent=1 // pred_check_branch
      %14 = sbr.rel (0) target = $region9
    $region8: #{simple_fc_forward.1} parent=1 // pred_region
      _
    $region9: #{simple_fc_forward.1} parent=1 // pred_fallthru
      _
    // Predicated region
    $region10: #{simple_fc_forward.1} parent=1 // pred_check
      _
    $region11: #{simple_fc_forward.1} parent=1 // pred_check_branch
      %16 = sbr.rel (0) target = $region13
    $region12: #{simple_fc_forward.1} parent=1 // pred_region
      _
    $region13: #{simple_fc_forward.1} parent=1 // pred_fallthru
      _
    // Predicated region
    $region14: #{simple_fc_forward.1} parent=1 // pred_check
      _
    $region15: #{simple_fc_forward.1} parent=1 // pred_check_branch
      %18 = sbr.rel (0) target = $region17
    $region16: #{simple_fc_forward.1} parent=1 // pred_region
      _
    $region17: #{simple_fc_forward.1} parent=1 // pred_fallthru
      _
    // Predicated region
    $region18: #{simple_fc_forward.1} parent=1 // pred_check
      _
    $region19: #{simple_fc_forward.1} parent=1 // pred_check_branch
      %20 = sbr.rel (0) target = $region21
    $region20: #{simple_fc_forward.1} parent=1 // pred_region
      _
    $region21: #{simple_fc_forward.1} parent=1 // pred_fallthru
      _
    %v22 = vld [vmem:[%s0] sm:$0xff]
    %v23 = vld [vmem:[%s0 + $0x8] sm:$0xff]
    %v24 = vld [vmem:[%s0 + $0x10] sm:$0xff]
    %v25 = vld [vmem:[%s0 + $0x18] sm:$0xff]
    %v26 = vld [vmem:[%s0 + $0x20] sm:$0xf]
    %v32 = vcombine.high %v22, %v22
    %v34 = vunpack.c.l.s4 1983009808
    %v35 = vunpack.c.0.s8 %v34
    %v36 = vlaneseq
    %v37 = vshrl.u32 %v36, 7
    %v38 = vsub.s32 %v35, %v37
    %v39 = vrot.slane %v22, %v38
    %v41 = vunpack.c.l.s4 1983009808
    %v42 = vunpack.c.0.s8 %v41
    %v43 = vlaneseq
    %v44 = vshrl.u32 %v43, 7
    %v45 = vsub.s32 %v42, %v44
    %v46 = vrot.slane %v32, %v45
    %v47 = vcombine.high %v39, %v39
    %v48 = vcombine.high %v46, %v46
    %v49 = vcombine.high %v23, %v23
    %v51 = vunpack.c.l.s4 1983009808
    %v52 = vunpack.c.0.s8 %v51
    %v53 = vlaneseq
    %v54 = vshrl.u32 %v53, 7
    %v55 = vsub.s32 %v52, %v54
    %v56 = vrot.slane %v23, %v55
    %v58 = vunpack.c.l.s4 1983009808
    %v59 = vunpack.c.0.s8 %v58
    %v60 = vlaneseq
    %v61 = vshrl.u32 %v60, 7
    %v62 = vsub.s32 %v59, %v61
    %v63 = vrot.slane %v49, %v62
    %v64 = vcombine.high %v56, %v56
    %v65 = vcombine.high %v63, %v63
    %v66 = vcombine.high %v24, %v24
    %v68 = vunpack.c.l.s4 1983009808
    %v69 = vunpack.c.0.s8 %v68
    %v70 = vlaneseq
    %v71 = vshrl.u32 %v70, 7
    %v72 = vsub.s32 %v69, %v71
    %v73 = vrot.slane %v24, %v72
    %v75 = vunpack.c.l.s4 1983009808
    %v76 = vunpack.c.0.s8 %v75
    %v77 = vlaneseq
    %v78 = vshrl.u32 %v77, 7
    %v79 = vsub.s32 %v76, %v78
    %v80 = vrot.slane %v66, %v79
    %v81 = vcombine.high %v73, %v73
    %v82 = vcombine.high %v80, %v80
    %v83 = vcombine.high %v25, %v25
    %v85 = vunpack.c.l.s4 1983009808
    %v86 = vunpack.c.0.s8 %v85
    %v87 = vlaneseq
    %v88 = vshrl.u32 %v87, 7
    %v89 = vsub.s32 %v86, %v88
    %v90 = vrot.slane %v25, %v89
    %v92 = vunpack.c.l.s4 1983009808
    %v93 = vunpack.c.0.s8 %v92
    %v94 = vlaneseq
    %v95 = vshrl.u32 %v94, 7
    %v96 = vsub.s32 %v93, %v95
    %v97 = vrot.slane %v83, %v96
    %v98 = vcombine.high %v90, %v90
    %v99 = vcombine.high %v97, %v97
    %v101 = vunpack.c.l.s4 1983009808
    %v102 = vunpack.c.0.s8 %v101
    %v103 = vlaneseq
    %v104 = vshrl.u32 %v103, 7
    %v105 = vsub.s32 %v102, %v104
    %v106 = vrot.slane %v26, %v105
    %v107 = vcombine.high %v106, %v106
    %v126 = vpack.c.bf16 %v39, %v39
    %v127 = vpack.c.bf16 %v47, %v47
    %v128 = vpack.c.bf16 %v46, %v46
    %v129 = vpack.c.bf16 %v48, %v48
    %v130 = vpack.c.bf16 %v56, %v56
    %v131 = vpack.c.bf16 %v64, %v64
    %v132 = vpack.c.bf16 %v63, %v63
    %v133 = vpack.c.bf16 %v65, %v65
    %v134 = vpack.c.bf16 %v73, %v73
    %v135 = vpack.c.bf16 %v81, %v81
    %v136 = vpack.c.bf16 %v80, %v80
    %v137 = vpack.c.bf16 %v82, %v82
    %v138 = vpack.c.bf16 %v90, %v90
    %v139 = vpack.c.bf16 %v98, %v98
    %v140 = vpack.c.bf16 %v97, %v97
    %v141 = vpack.c.bf16 %v99, %v99
    %v142 = vpack.c.bf16 %v106, %v106
    %v143 = vpack.c.bf16 %v107, %v107
    %v144 = vld [vmem:[%s1] sm:$0xf]
    %v145 = vld [vmem:[%s1 + $0x4] sm:$0xf]
    %v146 = vld [vmem:[%s1 + $0x8] sm:$0xf]
    %v147 = vld [vmem:[%s1 + $0xc] sm:$0xf]
    %v148 = vld [vmem:[%s1 + $0x10] sm:$0xf]
    %v149 = vld [vmem:[%s1 + $0x14] sm:$0xf]
    %v150 = vld [vmem:[%s1 + $0x18] sm:$0xf]
    %v151 = vld [vmem:[%s1 + $0x1c] sm:$0xf]
    %v152 = vld [vmem:[%s1 + $0x20] sm:$0xf]
    %v153 = vld [vmem:[%s1 + $0x24] sm:$0xf]
    %v154 = vld [vmem:[%s1 + $0x28] sm:$0xf]
    %v155 = vld [vmem:[%s1 + $0x2c] sm:$0xf]
    %v156 = vld [vmem:[%s1 + $0x30] sm:$0xf]
    %v157 = vld [vmem:[%s1 + $0x34] sm:$0xf]
    %v158 = vld [vmem:[%s1 + $0x38] sm:$0xf]
    %v159 = vld [vmem:[%s1 + $0x3c] sm:$0xf]
    %v160 = vld [vmem:[%s1 + $0x40] sm:$0xf]
    %v161 = vld [vmem:[%s1 + $0x44] sm:$0xf]
    %v162 = vld [vmem:[%s1 + $0x48] sm:$0xf]
    %v163 = vld [vmem:[%s1 + $0x4c] sm:$0xf]
    %v164 = vld [vmem:[%s1 + $0x50] sm:$0xf]
    %v165 = vld [vmem:[%s1 + $0x54] sm:$0xf]
    %v166 = vld [vmem:[%s1 + $0x58] sm:$0xf]
    %v167 = vld [vmem:[%s1 + $0x5c] sm:$0xf]
    %v168 = vld [vmem:[%s1 + $0x60] sm:$0xf]
    %v169 = vld [vmem:[%s1 + $0x64] sm:$0xf]
    %v170 = vld [vmem:[%s1 + $0x68] sm:$0xf]
    %v171 = vld [vmem:[%s1 + $0x6c] sm:$0xf]
    %v172 = vld [vmem:[%s1 + $0x70] sm:$0xf]
    %v173 = vld [vmem:[%s1 + $0x74] sm:$0xf]
    %v174 = vld [vmem:[%s1 + $0x78] sm:$0xf]
    %v175 = vld [vmem:[%s1 + $0x7c] sm:$0xf]
    %v176 = vld [vmem:[%s1 + $0x80] sm:$0xf]
    %v177 = vld [vmem:[%s1 + $0x84] sm:$0xf]
    %v178 = vld [vmem:[%s1 + $0x88] sm:$0xf]
    %v179 = vld [vmem:[%s1 + $0x8c] sm:$0xf]
    %v180 = vld [vmem:[%s1 + $0x90] sm:$0xf]
    %v181 = vld [vmem:[%s1 + $0x94] sm:$0xf]
    %v182 = vld [vmem:[%s1 + $0x98] sm:$0xf]
    %v183 = vld [vmem:[%s1 + $0x9c] sm:$0xf]
    %v184 = vld [vmem:[%s1 + $0xa0] sm:$0xf]
    %v185 = vld [vmem:[%s1 + $0xa4] sm:$0xf]
    %v186 = vld [vmem:[%s1 + $0xa8] sm:$0xf]
    %v187 = vld [vmem:[%s1 + $0xac] sm:$0xf]
    %v188 = vld [vmem:[%s1 + $0xb0] sm:$0xf]
    %v189 = vld [vmem:[%s1 + $0xb4] sm:$0xf]
    %v190 = vld [vmem:[%s1 + $0xb8] sm:$0xf]
    %v191 = vld [vmem:[%s1 + $0xbc] sm:$0xf]
    %v192 = vld [vmem:[%s1 + $0xc0] sm:$0xf]
    %v193 = vld [vmem:[%s1 + $0xc4] sm:$0xf]
    %v194 = vld [vmem:[%s1 + $0xc8] sm:$0xf]
    %v195 = vld [vmem:[%s1 + $0xcc] sm:$0xf]
    %v196 = vld [vmem:[%s1 + $0xd0] sm:$0xf]
    %v197 = vld [vmem:[%s1 + $0xd4] sm:$0xf]
    %v198 = vld [vmem:[%s1 + $0xd8] sm:$0xf]
    %v199 = vld [vmem:[%s1 + $0xdc] sm:$0xf]
    %v200 = vld [vmem:[%s1 + $0xe0] sm:$0xf]
    %v201 = vld [vmem:[%s1 + $0xe4] sm:$0xf]
    %v202 = vld [vmem:[%s1 + $0xe8] sm:$0xf]
    %v203 = vld [vmem:[%s1 + $0xec] sm:$0xf]
    %v204 = vld [vmem:[%s1 + $0xf0] sm:$0xf]
    %v205 = vld [vmem:[%s1 + $0xf4] sm:$0xf]
    %v206 = vld [vmem:[%s1 + $0xf8] sm:$0xf]
    %v207 = vld [vmem:[%s1 + $0xfc] sm:$0xf]
    %v208 = vld [vmem:[%s1 + $0x100] sm:$0xf]
    %v209 = vld [vmem:[%s1 + $0x104] sm:$0xf]
    %v210 = vld [vmem:[%s1 + $0x108] sm:$0xf]
    %v211 = vld [vmem:[%s1 + $0x10c] sm:$0xf]
    %v212 = vld [vmem:[%s1 + $0x110] sm:$0xf]
    %v213 = vld [vmem:[%s1 + $0x114] sm:$0xf]
    %v214 = vld [vmem:[%s1 + $0x118] sm:$0xf]
    %v215 = vld [vmem:[%s1 + $0x11c] sm:$0xf]
    %v216 = vld [vmem:[%s1 + $0x120] sm:$0xf]
    %v217 = vld [vmem:[%s1 + $0x124] sm:$0xf]
    %v218 = vld [vmem:[%s1 + $0x128] sm:$0xf]
    %v219 = vld [vmem:[%s1 + $0x12c] sm:$0xf]
    %v220 = vld [vmem:[%s1 + $0x130] sm:$0xf]
    %v221 = vld [vmem:[%s1 + $0x134] sm:$0xf]
    %v222 = vld [vmem:[%s1 + $0x138] sm:$0xf]
    %v223 = vld [vmem:[%s1 + $0x13c] sm:$0xf]
    %v224 = vld [vmem:[%s1 + $0x140] sm:$0xf]
    %v225 = vld [vmem:[%s1 + $0x144] sm:$0xf]
    %v226 = vld [vmem:[%s1 + $0x148] sm:$0xf]
    %v227 = vld [vmem:[%s1 + $0x14c] sm:$0xf]
    %v228 = vld [vmem:[%s1 + $0x150] sm:$0xf]
    %v229 = vld [vmem:[%s1 + $0x154] sm:$0xf]
    %v230 = vld [vmem:[%s1 + $0x158] sm:$0xf]
    %v231 = vld [vmem:[%s1 + $0x15c] sm:$0xf]
    %v232 = vld [vmem:[%s1 + $0x160] sm:$0xf]
    %v233 = vld [vmem:[%s1 + $0x164] sm:$0xf]
    %v234 = vld [vmem:[%s1 + $0x168] sm:$0xf]
    %v235 = vld [vmem:[%s1 + $0x16c] sm:$0xf]
    %v236 = vld [vmem:[%s1 + $0x170] sm:$0xf]
    %v237 = vld [vmem:[%s1 + $0x174] sm:$0xf]
    %v238 = vld [vmem:[%s1 + $0x178] sm:$0xf]
    %v239 = vld [vmem:[%s1 + $0x17c] sm:$0xf]
    %v240 = vld [vmem:[%s1 + $0x180] sm:$0xf]
    %v241 = vld [vmem:[%s1 + $0x184] sm:$0xf]
    %v242 = vld [vmem:[%s1 + $0x188] sm:$0xf]
    %v243 = vld [vmem:[%s1 + $0x18c] sm:$0xf]
    %v244 = vld [vmem:[%s1 + $0x190] sm:$0xf]
    %v245 = vld [vmem:[%s1 + $0x194] sm:$0xf]
    %v246 = vld [vmem:[%s1 + $0x198] sm:$0xf]
    %v247 = vld [vmem:[%s1 + $0x19c] sm:$0xf]
    %v248 = vld [vmem:[%s1 + $0x1a0] sm:$0xf]
    %v249 = vld [vmem:[%s1 + $0x1a4] sm:$0xf]
    %v250 = vld [vmem:[%s1 + $0x1a8] sm:$0xf]
    %v251 = vld [vmem:[%s1 + $0x1ac] sm:$0xf]
    %v252 = vld [vmem:[%s1 + $0x1b0] sm:$0xf]
    %v253 = vld [vmem:[%s1 + $0x1b4] sm:$0xf]
    %v254 = vld [vmem:[%s1 + $0x1b8] sm:$0xf]
    %v255 = vld [vmem:[%s1 + $0x1bc] sm:$0xf]
    %v256 = vld [vmem:[%s1 + $0x1c0] sm:$0xf]
    %v257 = vld [vmem:[%s1 + $0x1c4] sm:$0xf]
    %v258 = vld [vmem:[%s1 + $0x1c8] sm:$0xf]
    %v259 = vld [vmem:[%s1 + $0x1cc] sm:$0xf]
    %v260 = vld [vmem:[%s1 + $0x1d0] sm:$0xf]
    %v261 = vld [vmem:[%s1 + $0x1d4] sm:$0xf]
    %v262 = vld [vmem:[%s1 + $0x1d8] sm:$0xf]
    %v263 = vld [vmem:[%s1 + $0x1dc] sm:$0xf]
    %v264 = vld [vmem:[%s1 + $0x1e0] sm:$0xf]
    %v265 = vld [vmem:[%s1 + $0x1e4] sm:$0xf]
    %v266 = vld [vmem:[%s1 + $0x1e8] sm:$0xf]
    %v267 = vld [vmem:[%s1 + $0x1ec] sm:$0xf]
    %v268 = vld [vmem:[%s1 + $0x1f0] sm:$0xf]
    %v269 = vld [vmem:[%s1 + $0x1f4] sm:$0xf]
    %v270 = vld [vmem:[%s1 + $0x1f8] sm:$0xf]
    %v271 = vld [vmem:[%s1 + $0x1fc] sm:$0xf]
    %v272 = vld [vmem:[%s1 + $0x200] sm:$0xf]
    %v273 = vld [vmem:[%s1 + $0x204] sm:$0xf]
    %v274 = vld [vmem:[%s1 + $0x208] sm:$0xf]
    %v275 = vld [vmem:[%s1 + $0x20c] sm:$0xf]
    %v276 = vld [vmem:[%s1 + $0x210] sm:$0xf]
    %v277 = vld [vmem:[%s1 + $0x214] sm:$0xf]
    %v278 = vld [vmem:[%s1 + $0x218] sm:$0xf]
    %v279 = vld [vmem:[%s1 + $0x21c] sm:$0xf]
    %v280 = vld [vmem:[%s1 + $0x220] sm:$0xf]
    %v281 = vld [vmem:[%s1 + $0x224] sm:$0xf]
    %v282 = vld [vmem:[%s1 + $0x228] sm:$0xf]
    %v283 = vld [vmem:[%s1 + $0x22c] sm:$0xf]
    %v284 = vld [vmem:[%s1 + $0x230] sm:$0xf]
    %v285 = vld [vmem:[%s1 + $0x234] sm:$0xf]
    %v286 = vld [vmem:[%s1 + $0x238] sm:$0xf]
    %v287 = vld [vmem:[%s1 + $0x23c] sm:$0xf]
    %v288 = vld [vmem:[%s1 + $0x240] sm:$0xf]
    %v289 = vld [vmem:[%s1 + $0x244] sm:$0xf]
    %v290 = vld [vmem:[%s1 + $0x248] sm:$0xf]
    %v291 = vld [vmem:[%s1 + $0x24c] sm:$0xf]
    %v292 = vld [vmem:[%s1 + $0x250] sm:$0xf]
    %v293 = vld [vmem:[%s1 + $0x254] sm:$0xf]
    %v294 = vld [vmem:[%s1 + $0x258] sm:$0xf]
    %v295 = vld [vmem:[%s1 + $0x25c] sm:$0xf]
    %v296 = vld [vmem:[%s1 + $0x260] sm:$0xf]
    %v297 = vld [vmem:[%s1 + $0x264] sm:$0xf]
    %v298 = vld [vmem:[%s1 + $0x268] sm:$0xf]
    %v299 = vld [vmem:[%s1 + $0x26c] sm:$0xf]
    %v300 = vld [vmem:[%s1 + $0x270] sm:$0xf]
    %v301 = vld [vmem:[%s1 + $0x274] sm:$0xf]
    %v302 = vld [vmem:[%s1 + $0x278] sm:$0xf]
    %v303 = vld [vmem:[%s1 + $0x27c] sm:$0xf]
    %v304 = vld [vmem:[%s1 + $0x280] sm:$0xf]
    %v305 = vld [vmem:[%s1 + $0x284] sm:$0xf]
    %v306 = vld [vmem:[%s1 + $0x288] sm:$0xf]
    %v307 = vld [vmem:[%s1 + $0x28c] sm:$0xf]
    %v308 = vld [vmem:[%s1 + $0x290] sm:$0xf]
    %v309 = vld [vmem:[%s1 + $0x294] sm:$0xf]
    %v310 = vld [vmem:[%s1 + $0x298] sm:$0xf]
    %v311 = vld [vmem:[%s1 + $0x29c] sm:$0xf]
    %v312 = vld [vmem:[%s1 + $0x2a0] sm:$0xf]
    %v313 = vld [vmem:[%s1 + $0x2a4] sm:$0xf]
    %v314 = vld [vmem:[%s1 + $0x2a8] sm:$0xf]
    %v315 = vld [vmem:[%s1 + $0x2ac] sm:$0xf]
    %v316 = vld [vmem:[%s1 + $0x2b0] sm:$0xf]
    %v317 = vld [vmem:[%s1 + $0x2b4] sm:$0xf]
    %v318 = vld [vmem:[%s1 + $0x2b8] sm:$0xf]
    %v319 = vld [vmem:[%s1 + $0x2bc] sm:$0xf]
    %v320 = vld [vmem:[%s1 + $0x2c0] sm:$0xf]
    %v321 = vld [vmem:[%s1 + $0x2c4] sm:$0xf]
    %v322 = vld [vmem:[%s1 + $0x2c8] sm:$0xf]
    %v323 = vld [vmem:[%s1 + $0x2cc] sm:$0xf]
    %v324 = vld [vmem:[%s1 + $0x2d0] sm:$0xf]
    %v325 = vld [vmem:[%s1 + $0x2d4] sm:$0xf]
    %v326 = vld [vmem:[%s1 + $0x2d8] sm:$0xf]
    %v327 = vld [vmem:[%s1 + $0x2dc] sm:$0xf]
    %v328 = vld [vmem:[%s1 + $0x2e0] sm:$0xf]
    %v329 = vld [vmem:[%s1 + $0x2e4] sm:$0xf]
    %v330 = vld [vmem:[%s1 + $0x2e8] sm:$0xf]
    %v331 = vld [vmem:[%s1 + $0x2ec] sm:$0xf]
    %v332 = vld [vmem:[%s1 + $0x2f0] sm:$0xf]
    %v333 = vld [vmem:[%s1 + $0x2f4] sm:$0xf]
    %v334 = vld [vmem:[%s1 + $0x2f8] sm:$0xf]
    %v335 = vld [vmem:[%s1 + $0x2fc] sm:$0xf]
    %v336 = vld [vmem:[%s1 + $0x300] sm:$0xf]
    %v337 = vld [vmem:[%s1 + $0x304] sm:$0xf]
    %v338 = vld [vmem:[%s1 + $0x308] sm:$0xf]
    %v339 = vld [vmem:[%s1 + $0x30c] sm:$0xf]
    %v340 = vld [vmem:[%s1 + $0x310] sm:$0xf]
    %v341 = vld [vmem:[%s1 + $0x314] sm:$0xf]
    %v342 = vld [vmem:[%s1 + $0x318] sm:$0xf]
    %v343 = vld [vmem:[%s1 + $0x31c] sm:$0xf]
    %v344 = vld [vmem:[%s1 + $0x320] sm:$0xf]
    %v345 = vld [vmem:[%s1 + $0x324] sm:$0xf]
    %v346 = vld [vmem:[%s1 + $0x328] sm:$0xf]
    %v347 = vld [vmem:[%s1 + $0x32c] sm:$0xf]
    %v348 = vld [vmem:[%s1 + $0x330] sm:$0xf]
    %v349 = vld [vmem:[%s1 + $0x334] sm:$0xf]
    %v350 = vld [vmem:[%s1 + $0x338] sm:$0xf]
    %v351 = vld [vmem:[%s1 + $0x33c] sm:$0xf]
    %v352 = vld [vmem:[%s1 + $0x340] sm:$0xf]
    %v353 = vld [vmem:[%s1 + $0x344] sm:$0xf]
    %v354 = vld [vmem:[%s1 + $0x348] sm:$0xf]
    %v355 = vld [vmem:[%s1 + $0x34c] sm:$0xf]
    %v356 = vld [vmem:[%s1 + $0x350] sm:$0xf]
    %v357 = vld [vmem:[%s1 + $0x354] sm:$0xf]
    %v358 = vld [vmem:[%s1 + $0x358] sm:$0xf]
    %v359 = vld [vmem:[%s1 + $0x35c] sm:$0xf]
    %v360 = vld [vmem:[%s1 + $0x360] sm:$0xf]
    %v361 = vld [vmem:[%s1 + $0x364] sm:$0xf]
    %v362 = vld [vmem:[%s1 + $0x368] sm:$0xf]
    %v363 = vld [vmem:[%s1 + $0x36c] sm:$0xf]
    %v364 = vld [vmem:[%s1 + $0x370] sm:$0xf]
    %v365 = vld [vmem:[%s1 + $0x374] sm:$0xf]
    %v366 = vld [vmem:[%s1 + $0x378] sm:$0xf]
    %v367 = vld [vmem:[%s1 + $0x37c] sm:$0xf]
    %v368 = vld [vmem:[%s1 + $0x380] sm:$0xf]
    %v369 = vld [vmem:[%s1 + $0x384] sm:$0xf]
    %v370 = vld [vmem:[%s1 + $0x388] sm:$0xf]
    %v371 = vld [vmem:[%s1 + $0x38c] sm:$0xf]
    %v372 = vld [vmem:[%s1 + $0x390] sm:$0xf]
    %v373 = vld [vmem:[%s1 + $0x394] sm:$0xf]
    %v374 = vld [vmem:[%s1 + $0x398] sm:$0xf]
    %v375 = vld [vmem:[%s1 + $0x39c] sm:$0xf]
    %v376 = vld [vmem:[%s1 + $0x3a0] sm:$0xf]
    %v377 = vld [vmem:[%s1 + $0x3a4] sm:$0xf]
    %v378 = vld [vmem:[%s1 + $0x3a8] sm:$0xf]
    %v379 = vld [vmem:[%s1 + $0x3ac] sm:$0xf]
    %v380 = vld [vmem:[%s1 + $0x3b0] sm:$0xf]
    %v381 = vld [vmem:[%s1 + $0x3b4] sm:$0xf]
    %v382 = vld [vmem:[%s1 + $0x3b8] sm:$0xf]
    %v383 = vld [vmem:[%s1 + $0x3bc] sm:$0xf]
    %v384 = vld [vmem:[%s1 + $0x3c0] sm:$0xf]
    %v385 = vld [vmem:[%s1 + $0x3c4] sm:$0xf]
    %v386 = vld [vmem:[%s1 + $0x3c8] sm:$0xf]
    %v387 = vld [vmem:[%s1 + $0x3cc] sm:$0xf]
    %v388 = vld [vmem:[%s1 + $0x3d0] sm:$0xf]
    %v389 = vld [vmem:[%s1 + $0x3d4] sm:$0xf]
    %v390 = vld [vmem:[%s1 + $0x3d8] sm:$0xf]
    %v391 = vld [vmem:[%s1 + $0x3dc] sm:$0xf]
    %v392 = vld [vmem:[%s1 + $0x3e0] sm:$0xf]
    %v393 = vld [vmem:[%s1 + $0x3e4] sm:$0xf]
    %v394 = vld [vmem:[%s1 + $0x3e8] sm:$0xf]
    %v395 = vld [vmem:[%s1 + $0x3ec] sm:$0xf]
    %v396 = vld [vmem:[%s1 + $0x3f0] sm:$0xf]
    %v397 = vld [vmem:[%s1 + $0x3f4] sm:$0xf]
    %v398 = vld [vmem:[%s1 + $0x3f8] sm:$0xf]
    %v399 = vld [vmem:[%s1 + $0x3fc] sm:$0xf]
    %v400 = vld [vmem:[%s1 + $0x400] sm:$0xf]
    %v401 = vld [vmem:[%s1 + $0x404] sm:$0xf]
    %v402 = vld [vmem:[%s1 + $0x408] sm:$0xf]
    %v403 = vld [vmem:[%s1 + $0x40c] sm:$0xf]
    %v404 = vld [vmem:[%s1 + $0x410] sm:$0xf]
    %v405 = vld [vmem:[%s1 + $0x414] sm:$0xf]
    %v406 = vld [vmem:[%s1 + $0x418] sm:$0xf]
    %v407 = vld [vmem:[%s1 + $0x41c] sm:$0xf]
    %v408 = vld [vmem:[%s1 + $0x420] sm:$0xf]
    %v409 = vld [vmem:[%s1 + $0x424] sm:$0xf]
    %v410 = vld [vmem:[%s1 + $0x428] sm:$0xf]
    %v411 = vld [vmem:[%s1 + $0x42c] sm:$0xf]
    %v412 = vld [vmem:[%s1 + $0x430] sm:$0xf]
    %v413 = vld [vmem:[%s1 + $0x434] sm:$0xf]
    %v414 = vld [vmem:[%s1 + $0x438] sm:$0xf]
    %v415 = vld [vmem:[%s1 + $0x43c] sm:$0xf]
    %v416 = vld [vmem:[%s1 + $0x440] sm:$0xf]
    %v417 = vld [vmem:[%s1 + $0x444] sm:$0xf]
    %v418 = vld [vmem:[%s1 + $0x448] sm:$0xf]
    %v419 = vld [vmem:[%s1 + $0x44c] sm:$0xf]
    %v420 = vld [vmem:[%s1 + $0x450] sm:$0xf]
    %v421 = vld [vmem:[%s1 + $0x454] sm:$0xf]
    %v422 = vld [vmem:[%s1 + $0x458] sm:$0xf]
    %v423 = vld [vmem:[%s1 + $0x45c] sm:$0xf]
    %v424 = vld [vmem:[%s1 + $0x460] sm:$0xf]
    %v425 = vld [vmem:[%s1 + $0x464] sm:$0xf]
    %v426 = vld [vmem:[%s1 + $0x468] sm:$0xf]
    %v427 = vld [vmem:[%s1 + $0x46c] sm:$0xf]
    %v428 = vld [vmem:[%s1 + $0x470] sm:$0xf]
    %v429 = vld [vmem:[%s1 + $0x474] sm:$0xf]
    %v430 = vld [vmem:[%s1 + $0x478] sm:$0xf]
    %v431 = vld [vmem:[%s1 + $0x47c] sm:$0xf]
    %v432 = vld [vmem:[%s2] sm:$0x1]
    %v434 = vlaneseq
    %v435 = vshrl.u32 %v434, 7
    %v436 = vsub.s32 0, %v435
    %v437 = vrot.slane %v432, %v436
    %v727 = vunpack.c.l.b16 %v144
    %v728 = vunpack.c.l.b16 %v145
    %v729 = vunpack.c.l.b16 %v146
    %v730 = vunpack.c.l.b16 %v147
    %v731 = vunpack.c.l.b16 %v148
    %v732 = vunpack.c.l.b16 %v149
    %v733 = vunpack.c.l.b16 %v150
    %v734 = vunpack.c.l.b16 %v151
    %v735 = vunpack.c.l.b16 %v152
    %v736 = vunpack.c.l.b16 %v153
    %v737 = vunpack.c.l.b16 %v154
    %v738 = vunpack.c.l.b16 %v155
    %v739 = vunpack.c.l.b16 %v156
    %v740 = vunpack.c.l.b16 %v157
    %v741 = vunpack.c.l.b16 %v158
    %v742 = vunpack.c.l.b16 %v159
    %v743 = vunpack.c.l.b16 %v160
    %v744 = vunpack.c.l.b16 %v161
    %v745 = vunpack.c.l.b16 %v162
    %v746 = vunpack.c.l.b16 %v163
    %v747 = vunpack.c.l.b16 %v164
    %v748 = vunpack.c.l.b16 %v165
    %v749 = vunpack.c.l.b16 %v166
    %v750 = vunpack.c.l.b16 %v167
    %v751 = vunpack.c.l.b16 %v168
    %v752 = vunpack.c.l.b16 %v169
    %v753 = vunpack.c.l.b16 %v170
    %v754 = vunpack.c.l.b16 %v171
    %v755 = vunpack.c.l.b16 %v172
    %v756 = vunpack.c.l.b16 %v173
    %v757 = vunpack.c.l.b16 %v174
    %v758 = vunpack.c.l.b16 %v175
    %v759 = vunpack.c.l.b16 %v176
    %v760 = vunpack.c.l.b16 %v177
    %v761 = vunpack.c.l.b16 %v178
    %v762 = vunpack.c.l.b16 %v179
    %v763 = vunpack.c.l.b16 %v180
    %v764 = vunpack.c.l.b16 %v181
    %v765 = vunpack.c.l.b16 %v182
    %v766 = vunpack.c.l.b16 %v183
    %v767 = vunpack.c.l.b16 %v184
    %v768 = vunpack.c.l.b16 %v185
    %v769 = vunpack.c.l.b16 %v186
    %v770 = vunpack.c.l.b16 %v187
    %v771 = vunpack.c.l.b16 %v188
    %v772 = vunpack.c.l.b16 %v189
    %v773 = vunpack.c.l.b16 %v190
    %v774 = vunpack.c.l.b16 %v191
    %v775 = vunpack.c.l.b16 %v192
    %v776 = vunpack.c.l.b16 %v193
    %v777 = vunpack.c.l.b16 %v194
    %v778 = vunpack.c.l.b16 %v195
    %v779 = vunpack.c.l.b16 %v196
    %v780 = vunpack.c.l.b16 %v197
    %v781 = vunpack.c.l.b16 %v198
    %v782 = vunpack.c.l.b16 %v199
    %v783 = vunpack.c.l.b16 %v200
    %v784 = vunpack.c.l.b16 %v201
    %v785 = vunpack.c.l.b16 %v202
    %v786 = vunpack.c.l.b16 %v203
    %v787 = vunpack.c.l.b16 %v204
    %v788 = vunpack.c.l.b16 %v205
    %v789 = vunpack.c.l.b16 %v206
    %v790 = vunpack.c.l.b16 %v207
    %v791 = vunpack.c.l.b16 %v208
    %v792 = vunpack.c.l.b16 %v209
    %v793 = vunpack.c.l.b16 %v210
    %v794 = vunpack.c.l.b16 %v211
    %v795 = vunpack.c.l.b16 %v212
    %v796 = vunpack.c.l.b16 %v213
    %v797 = vunpack.c.l.b16 %v214
    %v798 = vunpack.c.l.b16 %v215
    %v799 = vunpack.c.l.b16 %v216
    %v800 = vunpack.c.l.b16 %v217
    %v801 = vunpack.c.l.b16 %v218
    %v802 = vunpack.c.l.b16 %v219
    %v803 = vunpack.c.l.b16 %v220
    %v804 = vunpack.c.l.b16 %v221
    %v805 = vunpack.c.l.b16 %v222
    %v806 = vunpack.c.l.b16 %v223
    %v807 = vunpack.c.l.b16 %v224
    %v808 = vunpack.c.l.b16 %v225
    %v809 = vunpack.c.l.b16 %v226
    %v810 = vunpack.c.l.b16 %v227
    %v811 = vunpack.c.l.b16 %v228
    %v812 = vunpack.c.l.b16 %v229
    %v813 = vunpack.c.l.b16 %v230
    %v814 = vunpack.c.l.b16 %v231
    %v815 = vunpack.c.l.b16 %v232
    %v816 = vunpack.c.l.b16 %v233
    %v817 = vunpack.c.l.b16 %v234
    %v818 = vunpack.c.l.b16 %v235
    %v819 = vunpack.c.l.b16 %v236
    %v820 = vunpack.c.l.b16 %v237
    %v821 = vunpack.c.l.b16 %v238
    %v822 = vunpack.c.l.b16 %v239
    %v823 = vunpack.c.l.b16 %v240
    %v824 = vunpack.c.l.b16 %v241
    %v825 = vunpack.c.l.b16 %v242
    %v826 = vunpack.c.l.b16 %v243
    %v827 = vunpack.c.l.b16 %v244
    %v828 = vunpack.c.l.b16 %v245
    %v829 = vunpack.c.l.b16 %v246
    %v830 = vunpack.c.l.b16 %v247
    %v831 = vunpack.c.l.b16 %v248
    %v832 = vunpack.c.l.b16 %v249
    %v833 = vunpack.c.l.b16 %v250
    %v834 = vunpack.c.l.b16 %v251
    %v835 = vunpack.c.l.b16 %v252
    %v836 = vunpack.c.l.b16 %v253
    %v837 = vunpack.c.l.b16 %v254
    %v838 = vunpack.c.l.b16 %v255
    %v839 = vunpack.c.l.b16 %v256
    %v840 = vunpack.c.l.b16 %v257
    %v841 = vunpack.c.l.b16 %v258
    %v842 = vunpack.c.l.b16 %v259
    %v843 = vunpack.c.l.b16 %v260
    %v844 = vunpack.c.l.b16 %v261
    %v845 = vunpack.c.l.b16 %v262
    %v846 = vunpack.c.l.b16 %v263
    %v847 = vunpack.c.l.b16 %v264
    %v848 = vunpack.c.l.b16 %v265
    %v849 = vunpack.c.l.b16 %v266
    %v850 = vunpack.c.l.b16 %v267
    %v851 = vunpack.c.l.b16 %v268
    %v852 = vunpack.c.l.b16 %v269
    %v853 = vunpack.c.l.b16 %v270
    %v854 = vunpack.c.l.b16 %v271
    %v855 = vunpack.c.l.b16 %v272
    %v856 = vunpack.c.l.b16 %v273
    %v857 = vunpack.c.l.b16 %v274
    %v858 = vunpack.c.l.b16 %v275
    %v859 = vunpack.c.l.b16 %v276
    %v860 = vunpack.c.l.b16 %v277
    %v861 = vunpack.c.l.b16 %v278
    %v862 = vunpack.c.l.b16 %v279
    %v863 = vunpack.c.l.b16 %v280
    %v864 = vunpack.c.l.b16 %v281
    %v865 = vunpack.c.l.b16 %v282
    %v866 = vunpack.c.l.b16 %v283
    %v867 = vunpack.c.l.b16 %v284
    %v868 = vunpack.c.l.b16 %v285
    %v869 = vunpack.c.l.b16 %v286
    %v870 = vunpack.c.l.b16 %v287
    %v871 = vunpack.c.l.b16 %v288
    %v872 = vunpack.c.l.b16 %v289
    %v873 = vunpack.c.l.b16 %v290
    %v874 = vunpack.c.l.b16 %v291
    %v875 = vunpack.c.l.b16 %v292
    %v876 = vunpack.c.l.b16 %v293
    %v877 = vunpack.c.l.b16 %v294
    %v878 = vunpack.c.l.b16 %v295
    %v879 = vunpack.c.l.b16 %v296
    %v880 = vunpack.c.l.b16 %v297
    %v881 = vunpack.c.l.b16 %v298
    %v882 = vunpack.c.l.b16 %v299
    %v883 = vunpack.c.l.b16 %v300
    %v884 = vunpack.c.l.b16 %v301
    %v885 = vunpack.c.l.b16 %v302
    %v886 = vunpack.c.l.b16 %v303
    %v887 = vunpack.c.l.b16 %v304
    %v888 = vunpack.c.l.b16 %v305
    %v889 = vunpack.c.l.b16 %v306
    %v890 = vunpack.c.l.b16 %v307
    %v891 = vunpack.c.l.b16 %v308
    %v892 = vunpack.c.l.b16 %v309
    %v893 = vunpack.c.l.b16 %v310
    %v894 = vunpack.c.l.b16 %v311
    %v895 = vunpack.c.l.b16 %v312
    %v896 = vunpack.c.l.b16 %v313
    %v897 = vunpack.c.l.b16 %v314
    %v898 = vunpack.c.l.b16 %v315
    %v899 = vunpack.c.l.b16 %v316
    %v900 = vunpack.c.l.b16 %v317
    %v901 = vunpack.c.l.b16 %v318
    %v902 = vunpack.c.l.b16 %v319
    %v903 = vunpack.c.l.b16 %v320
    %v904 = vunpack.c.l.b16 %v321
    %v905 = vunpack.c.l.b16 %v322
    %v906 = vunpack.c.l.b16 %v323
    %v907 = vunpack.c.l.b16 %v324
    %v908 = vunpack.c.l.b16 %v325
    %v909 = vunpack.c.l.b16 %v326
    %v910 = vunpack.c.l.b16 %v327
    %v911 = vunpack.c.l.b16 %v328
    %v912 = vunpack.c.l.b16 %v329
    %v913 = vunpack.c.l.b16 %v330
    %v914 = vunpack.c.l.b16 %v331
    %v915 = vunpack.c.l.b16 %v332
    %v916 = vunpack.c.l.b16 %v333
    %v917 = vunpack.c.l.b16 %v334
    %v918 = vunpack.c.l.b16 %v335
    %v919 = vunpack.c.l.b16 %v336
    %v920 = vunpack.c.l.b16 %v337
    %v921 = vunpack.c.l.b16 %v338
    %v922 = vunpack.c.l.b16 %v339
    %v923 = vunpack.c.l.b16 %v340
    %v924 = vunpack.c.l.b16 %v341
    %v925 = vunpack.c.l.b16 %v342
    %v926 = vunpack.c.l.b16 %v343
    %v927 = vunpack.c.l.b16 %v344
    %v928 = vunpack.c.l.b16 %v345
    %v929 = vunpack.c.l.b16 %v346
    %v930 = vunpack.c.l.b16 %v347
    %v931 = vunpack.c.l.b16 %v348
    %v932 = vunpack.c.l.b16 %v349
    %v933 = vunpack.c.l.b16 %v350
    %v934 = vunpack.c.l.b16 %v351
    %v935 = vunpack.c.l.b16 %v352
    %v936 = vunpack.c.l.b16 %v353
    %v937 = vunpack.c.l.b16 %v354
    %v938 = vunpack.c.l.b16 %v355
    %v939 = vunpack.c.l.b16 %v356
    %v940 = vunpack.c.l.b16 %v357
    %v941 = vunpack.c.l.b16 %v358
    %v942 = vunpack.c.l.b16 %v359
    %v943 = vunpack.c.l.b16 %v360
    %v944 = vunpack.c.l.b16 %v361
    %v945 = vunpack.c.l.b16 %v362
    %v946 = vunpack.c.l.b16 %v363
    %v947 = vunpack.c.l.b16 %v364
    %v948 = vunpack.c.l.b16 %v365
    %v949 = vunpack.c.l.b16 %v366
    %v950 = vunpack.c.l.b16 %v367
    %v951 = vunpack.c.l.b16 %v368
    %v952 = vunpack.c.l.b16 %v369
    %v953 = vunpack.c.l.b16 %v370
    %v954 = vunpack.c.l.b16 %v371
    %v955 = vunpack.c.l.b16 %v372
    %v956 = vunpack.c.l.b16 %v373
    %v957 = vunpack.c.l.b16 %v374
    %v958 = vunpack.c.l.b16 %v375
    %v959 = vunpack.c.l.b16 %v376
    %v960 = vunpack.c.l.b16 %v377
    %v961 = vunpack.c.l.b16 %v378
    %v962 = vunpack.c.l.b16 %v379
    %v963 = vunpack.c.l.b16 %v380
    %v964 = vunpack.c.l.b16 %v381
    %v965 = vunpack.c.l.b16 %v382
    %v966 = vunpack.c.l.b16 %v383
    %v967 = vunpack.c.l.b16 %v384
    %v968 = vunpack.c.l.b16 %v385
    %v969 = vunpack.c.l.b16 %v386
    %v970 = vunpack.c.l.b16 %v387
    %v971 = vunpack.c.l.b16 %v388
    %v972 = vunpack.c.l.b16 %v389
    %v973 = vunpack.c.l.b16 %v390
    %v974 = vunpack.c.l.b16 %v391
    %v975 = vunpack.c.l.b16 %v392
    %v976 = vunpack.c.l.b16 %v393
    %v977 = vunpack.c.l.b16 %v394
    %v978 = vunpack.c.l.b16 %v395
    %v979 = vunpack.c.l.b16 %v396
    %v980 = vunpack.c.l.b16 %v397
    %v981 = vunpack.c.l.b16 %v398
    %v982 = vunpack.c.l.b16 %v399
    %v983 = vunpack.c.l.b16 %v400
    %v984 = vunpack.c.l.b16 %v401
    %v985 = vunpack.c.l.b16 %v402
    %v986 = vunpack.c.l.b16 %v403
    %v987 = vunpack.c.l.b16 %v404
    %v988 = vunpack.c.l.b16 %v405
    %v989 = vunpack.c.l.b16 %v406
    %v990 = vunpack.c.l.b16 %v407
    %v991 = vunpack.c.l.b16 %v408
    %v992 = vunpack.c.l.b16 %v409
    %v993 = vunpack.c.l.b16 %v410
    %v994 = vunpack.c.l.b16 %v411
    %v995 = vunpack.c.l.b16 %v412
    %v996 = vunpack.c.l.b16 %v413
    %v997 = vunpack.c.l.b16 %v414
    %v998 = vunpack.c.l.b16 %v415
    %v999 = vunpack.c.l.b16 %v416
    %v1000 = vunpack.c.l.b16 %v417
    %v1001 = vunpack.c.l.b16 %v418
    %v1002 = vunpack.c.l.b16 %v419
    %v1003 = vunpack.c.l.b16 %v420
    %v1004 = vunpack.c.l.b16 %v421
    %v1005 = vunpack.c.l.b16 %v422
    %v1006 = vunpack.c.l.b16 %v423
    %v1007 = vunpack.c.l.b16 %v424
    %v1008 = vunpack.c.l.b16 %v425
    %v1009 = vunpack.c.l.b16 %v426
    %v1010 = vunpack.c.l.b16 %v427
    %v1011 = vunpack.c.l.b16 %v428
    %v1012 = vunpack.c.l.b16 %v429
    %v1013 = vunpack.c.l.b16 %v430
    %v1014 = vunpack.c.l.b16 %v431
    %v1015 = vpack.c.b16 %v728, %v727
    %v1016 = vpack.c.b16 %v730, %v729
    %v1017 = vpack.c.b16 %v732, %v731
    %v1018 = vpack.c.b16 %v734, %v733
    %v1019 = vpack.c.b16 %v736, %v735
    %v1020 = vpack.c.b16 %v738, %v737
    %v1021 = vpack.c.b16 %v740, %v739
    %v1022 = vpack.c.b16 %v742, %v741
    %v1023 = vpack.c.b16 %v744, %v743
    %v1024 = vpack.c.b16 %v746, %v745
    %v1025 = vpack.c.b16 %v748, %v747
    %v1026 = vpack.c.b16 %v750, %v749
    %v1027 = vpack.c.b16 %v752, %v751
    %v1028 = vpack.c.b16 %v754, %v753
    %v1029 = vpack.c.b16 %v756, %v755
    %v1030 = vpack.c.b16 %v758, %v757
    %v1031 = vpack.c.b16 %v760, %v759
    %v1032 = vpack.c.b16 %v762, %v761
    %v1033 = vpack.c.b16 %v764, %v763
    %v1034 = vpack.c.b16 %v766, %v765
    %v1035 = vpack.c.b16 %v768, %v767
    %v1036 = vpack.c.b16 %v770, %v769
    %v1037 = vpack.c.b16 %v772, %v771
    %v1038 = vpack.c.b16 %v774, %v773
    %v1039 = vpack.c.b16 %v776, %v775
    %v1040 = vpack.c.b16 %v778, %v777
    %v1041 = vpack.c.b16 %v780, %v779
    %v1042 = vpack.c.b16 %v782, %v781
    %v1043 = vpack.c.b16 %v784, %v783
    %v1044 = vpack.c.b16 %v786, %v785
    %v1045 = vpack.c.b16 %v788, %v787
    %v1046 = vpack.c.b16 %v790, %v789
    %v1047 = vpack.c.b16 %v792, %v791
    %v1048 = vpack.c.b16 %v794, %v793
    %v1049 = vpack.c.b16 %v796, %v795
    %v1050 = vpack.c.b16 %v798, %v797
    %v1051 = vpack.c.b16 %v800, %v799
    %v1052 = vpack.c.b16 %v802, %v801
    %v1053 = vpack.c.b16 %v804, %v803
    %v1054 = vpack.c.b16 %v806, %v805
    %v1055 = vpack.c.b16 %v808, %v807
    %v1056 = vpack.c.b16 %v810, %v809
    %v1057 = vpack.c.b16 %v812, %v811
    %v1058 = vpack.c.b16 %v814, %v813
    %v1059 = vpack.c.b16 %v816, %v815
    %v1060 = vpack.c.b16 %v818, %v817
    %v1061 = vpack.c.b16 %v820, %v819
    %v1062 = vpack.c.b16 %v822, %v821
    %v1063 = vpack.c.b16 %v824, %v823
    %v1064 = vpack.c.b16 %v826, %v825
    %v1065 = vpack.c.b16 %v828, %v827
    %v1066 = vpack.c.b16 %v830, %v829
    %v1067 = vpack.c.b16 %v832, %v831
    %v1068 = vpack.c.b16 %v834, %v833
    %v1069 = vpack.c.b16 %v836, %v835
    %v1070 = vpack.c.b16 %v838, %v837
    %v1071 = vpack.c.b16 %v840, %v839
    %v1072 = vpack.c.b16 %v842, %v841
    %v1073 = vpack.c.b16 %v844, %v843
    %v1074 = vpack.c.b16 %v846, %v845
    %v1075 = vpack.c.b16 %v848, %v847
    %v1076 = vpack.c.b16 %v850, %v849
    %v1077 = vpack.c.b16 %v852, %v851
    %v1078 = vpack.c.b16 %v854, %v853
    %v1079 = vpack.c.b16 %v856, %v855
    %v1080 = vpack.c.b16 %v858, %v857
    %v1081 = vpack.c.b16 %v860, %v859
    %v1082 = vpack.c.b16 %v862, %v861
    %v1083 = vpack.c.b16 %v864, %v863
    %v1084 = vpack.c.b16 %v866, %v865
    %v1085 = vpack.c.b16 %v868, %v867
    %v1086 = vpack.c.b16 %v870, %v869
    %v1087 = vpack.c.b16 %v872, %v871
    %v1088 = vpack.c.b16 %v874, %v873
    %v1089 = vpack.c.b16 %v876, %v875
    %v1090 = vpack.c.b16 %v878, %v877
    %v1091 = vpack.c.b16 %v880, %v879
    %v1092 = vpack.c.b16 %v882, %v881
    %v1093 = vpack.c.b16 %v884, %v883
    %v1094 = vpack.c.b16 %v886, %v885
    %v1095 = vpack.c.b16 %v888, %v887
    %v1096 = vpack.c.b16 %v890, %v889
    %v1097 = vpack.c.b16 %v892, %v891
    %v1098 = vpack.c.b16 %v894, %v893
    %v1099 = vpack.c.b16 %v896, %v895
    %v1100 = vpack.c.b16 %v898, %v897
    %v1101 = vpack.c.b16 %v900, %v899
    %v1102 = vpack.c.b16 %v902, %v901
    %v1103 = vpack.c.b16 %v904, %v903
    %v1104 = vpack.c.b16 %v906, %v905
    %v1105 = vpack.c.b16 %v908, %v907
    %v1106 = vpack.c.b16 %v910, %v909
    %v1107 = vpack.c.b16 %v912, %v911
    %v1108 = vpack.c.b16 %v914, %v913
    %v1109 = vpack.c.b16 %v916, %v915
    %v1110 = vpack.c.b16 %v918, %v917
    %v1111 = vpack.c.b16 %v920, %v919
    %v1112 = vpack.c.b16 %v922, %v921
    %v1113 = vpack.c.b16 %v924, %v923
    %v1114 = vpack.c.b16 %v926, %v925
    %v1115 = vpack.c.b16 %v928, %v927
    %v1116 = vpack.c.b16 %v930, %v929
    %v1117 = vpack.c.b16 %v932, %v931
    %v1118 = vpack.c.b16 %v934, %v933
    %v1119 = vpack.c.b16 %v936, %v935
    %v1120 = vpack.c.b16 %v938, %v937
    %v1121 = vpack.c.b16 %v940, %v939
    %v1122 = vpack.c.b16 %v942, %v941
    %v1123 = vpack.c.b16 %v944, %v943
    %v1124 = vpack.c.b16 %v946, %v945
    %v1125 = vpack.c.b16 %v948, %v947
    %v1126 = vpack.c.b16 %v950, %v949
    %v1127 = vpack.c.b16 %v952, %v951
    %v1128 = vpack.c.b16 %v954, %v953
    %v1129 = vpack.c.b16 %v956, %v955
    %v1130 = vpack.c.b16 %v958, %v957
    %v1131 = vpack.c.b16 %v960, %v959
    %v1132 = vpack.c.b16 %v962, %v961
    %v1133 = vpack.c.b16 %v964, %v963
    %v1134 = vpack.c.b16 %v966, %v965
    %v1135 = vpack.c.b16 %v968, %v967
    %v1136 = vpack.c.b16 %v970, %v969
    %v1137 = vpack.c.b16 %v972, %v971
    %v1138 = vpack.c.b16 %v974, %v973
    %v1139 = vpack.c.b16 %v976, %v975
    %v1140 = vpack.c.b16 %v978, %v977
    %v1141 = vpack.c.b16 %v980, %v979
    %v1142 = vpack.c.b16 %v982, %v981
    %v1143 = vpack.c.b16 %v984, %v983
    %v1144 = vpack.c.b16 %v986, %v985
    %v1145 = vpack.c.b16 %v988, %v987
    %v1146 = vpack.c.b16 %v990, %v989
    %v1147 = vpack.c.b16 %v992, %v991
    %v1148 = vpack.c.b16 %v994, %v993
    %v1149 = vpack.c.b16 %v996, %v995
    %v1150 = vpack.c.b16 %v998, %v997
    %v1151 = vpack.c.b16 %v1000, %v999
    %v1152 = vpack.c.b16 %v1002, %v1001
    %v1153 = vpack.c.b16 %v1004, %v1003
    %v1154 = vpack.c.b16 %v1006, %v1005
    %v1155 = vpack.c.b16 %v1008, %v1007
    %v1156 = vpack.c.b16 %v1010, %v1009
    %v1157 = vpack.c.b16 %v1012, %v1011
    %v1158 = vpack.c.b16 %v1014, %v1013
    %1303 = vmatprep.subr.bf16.mxu0 0
    %1304 = vmatpush1.bf16.msra.mxu0 %v1022
    %1305 = vmatprep.subr.bf16.mxu0 0
    %1306 = vmatpush1.bf16.msra.mxu0 %v1021
    %1307 = vmatprep.subr.bf16.mxu0 0
    %1308 = vmatpush1.bf16.msra.mxu0 %v1020
    %1309 = vmatprep.subr.bf16.mxu0 0
    %1310 = vmatpush1.bf16.msra.mxu0 %v1019
    %1311 = vmatprep.subr.bf16.mxu0 0
    %1312 = vmatpush1.bf16.msra.mxu0 %v1018
    %1313 = vmatprep.subr.bf16.mxu0 0
    %1314 = vmatpush1.bf16.msra.mxu0 %v1017
    %1315 = vmatprep.subr.bf16.mxu0 0
    %1316 = vmatpush1.bf16.msra.mxu0 %v1016
    %1317 = vmatprep.subr.bf16.mxu0 0
    %1318 = vmatpush1.bf16.msra.mxu0 %v1015
    %1319 = vmatprep.subr.bf16.mxu0 0
    %1320 = vmatpush2.bf16.msra.mxu0 %v1030
    %1321 = vmatprep.subr.bf16.mxu0 0
    %1322 = vmatpush2.bf16.msra.mxu0 %v1029
    %1323 = vmatprep.subr.bf16.mxu0 0
    %1324 = vmatpush2.bf16.msra.mxu0 %v1028
    %1325 = vmatprep.subr.bf16.mxu0 0
    %1326 = vmatpush2.bf16.msra.mxu0 %v1027
    %1327 = vmatprep.subr.bf16.mxu0 0
    %1328 = vmatpush2.bf16.msra.mxu0 %v1026
    %1329 = vmatprep.subr.bf16.mxu0 0
    %1330 = vmatpush2.bf16.msra.mxu0 %v1025
    %1331 = vmatprep.subr.bf16.mxu0 0
    %1332 = vmatpush2.bf16.msra.mxu0 %v1024
    %1333 = vmatprep.subr.bf16.mxu0 0
    %1334 = vmatpush2.bf16.msra.mxu0 %v1023
    %1335 = vmatprep.mubr.bf16.mxu0 %v127
    %1336 = vmatmul.mubr.bf16.gmra.mxu0 %v126
    %v1337 = vpop.f32.mrf.mxu0
    %v1338 = vadd.f32 %v437, %v1337
    %v1339 = vpop.f32.mrf.mxu0
    %v1340 = vpop.f32.mrf.mxu0
    %v1341 = vpop.f32.mrf.mxu0
    %1342 = vdwg.mxu0
    %1343 = vmatprep.subr.bf16.mxu0 0
    %1344 = vmatpush1.bf16.msra.mxu0 %v1038
    %1345 = vmatprep.subr.bf16.mxu0 0
    %1346 = vmatpush1.bf16.msra.mxu0 %v1037
    %1347 = vmatprep.subr.bf16.mxu0 0
    %1348 = vmatpush1.bf16.msra.mxu0 %v1036
    %1349 = vmatprep.subr.bf16.mxu0 0
    %1350 = vmatpush1.bf16.msra.mxu0 %v1035
    %1351 = vmatprep.subr.bf16.mxu0 0
    %1352 = vmatpush1.bf16.msra.mxu0 %v1034
    %1353 = vmatprep.subr.bf16.mxu0 0
    %1354 = vmatpush1.bf16.msra.mxu0 %v1033
    %1355 = vmatprep.subr.bf16.mxu0 0
    %1356 = vmatpush1.bf16.msra.mxu0 %v1032
    %1357 = vmatprep.subr.bf16.mxu0 0
    %1358 = vmatpush1.bf16.msra.mxu0 %v1031
    %1359 = vmatprep.subr.bf16.mxu0 0
    %1360 = vmatpush2.bf16.msra.mxu0 %v1046
    %1361 = vmatprep.subr.bf16.mxu0 0
    %1362 = vmatpush2.bf16.msra.mxu0 %v1045
    %1363 = vmatprep.subr.bf16.mxu0 0
    %1364 = vmatpush2.bf16.msra.mxu0 %v1044
    %1365 = vmatprep.subr.bf16.mxu0 0
    %1366 = vmatpush2.bf16.msra.mxu0 %v1043
    %1367 = vmatprep.subr.bf16.mxu0 0
    %1368 = vmatpush2.bf16.msra.mxu0 %v1042
    %1369 = vmatprep.subr.bf16.mxu0 0
    %1370 = vmatpush2.bf16.msra.mxu0 %v1041
    %1371 = vmatprep.subr.bf16.mxu0 0
    %1372 = vmatpush2.bf16.msra.mxu0 %v1040
    %1373 = vmatprep.subr.bf16.mxu0 0
    %1374 = vmatpush2.bf16.msra.mxu0 %v1039
    %1375 = vmatprep.mubr.bf16.mxu0 %v129
    %1376 = vmatmul.mubr.bf16.gmra.mxu0 %v128
    %v1377 = vpop.f32.mrf.mxu0
    %v1378 = vadd.f32 %v1338, %v1377
    %v1379 = vpop.f32.mrf.mxu0
    %v1380 = vpop.f32.mrf.mxu0
    %v1381 = vpop.f32.mrf.mxu0
    %1382 = vdwg.mxu0
    %1383 = vmatprep.subr.bf16.mxu0 0
    %1384 = vmatpush1.bf16.msra.mxu0 %v1054
    %1385 = vmatprep.subr.bf16.mxu0 0
    %1386 = vmatpush1.bf16.msra.mxu0 %v1053
    %1387 = vmatprep.subr.bf16.mxu0 0
    %1388 = vmatpush1.bf16.msra.mxu0 %v1052
    %1389 = vmatprep.subr.bf16.mxu0 0
    %1390 = vmatpush1.bf16.msra.mxu0 %v1051
    %1391 = vmatprep.subr.bf16.mxu0 0
    %1392 = vmatpush1.bf16.msra.mxu0 %v1050
    %1393 = vmatprep.subr.bf16.mxu0 0
    %1394 = vmatpush1.bf16.msra.mxu0 %v1049
    %1395 = vmatprep.subr.bf16.mxu0 0
    %1396 = vmatpush1.bf16.msra.mxu0 %v1048
    %1397 = vmatprep.subr.bf16.mxu0 0
    %1398 = vmatpush1.bf16.msra.mxu0 %v1047
    %1399 = vmatprep.subr.bf16.mxu0 0
    %1400 = vmatpush2.bf16.msra.mxu0 %v1062
    %1401 = vmatprep.subr.bf16.mxu0 0
    %1402 = vmatpush2.bf16.msra.mxu0 %v1061
    %1403 = vmatprep.subr.bf16.mxu0 0
    %1404 = vmatpush2.bf16.msra.mxu0 %v1060
    %1405 = vmatprep.subr.bf16.mxu0 0
    %1406 = vmatpush2.bf16.msra.mxu0 %v1059
    %1407 = vmatprep.subr.bf16.mxu0 0
    %1408 = vmatpush2.bf16.msra.mxu0 %v1058
    %1409 = vmatprep.subr.bf16.mxu0 0
    %1410 = vmatpush2.bf16.msra.mxu0 %v1057
    %1411 = vmatprep.subr.bf16.mxu0 0
    %1412 = vmatpush2.bf16.msra.mxu0 %v1056
    %1413 = vmatprep.subr.bf16.mxu0 0
    %1414 = vmatpush2.bf16.msra.mxu0 %v1055
    %1415 = vmatprep.mubr.bf16.mxu0 %v131
    %1416 = vmatmul.mubr.bf16.gmra.mxu0 %v130
    %v1417 = vpop.f32.mrf.mxu0
    %v1418 = vadd.f32 %v1378, %v1417
    %v1419 = vpop.f32.mrf.mxu0
    %v1420 = vpop.f32.mrf.mxu0
    %v1421 = vpop.f32.mrf.mxu0
    %1422 = vdwg.mxu0
    %1423 = vmatprep.subr.bf16.mxu0 0
    %1424 = vmatpush1.bf16.msra.mxu0 %v1070
    %1425 = vmatprep.subr.bf16.mxu0 0
    %1426 = vmatpush1.bf16.msra.mxu0 %v1069
    %1427 = vmatprep.subr.bf16.mxu0 0
    %1428 = vmatpush1.bf16.msra.mxu0 %v1068
    %1429 = vmatprep.subr.bf16.mxu0 0
    %1430 = vmatpush1.bf16.msra.mxu0 %v1067
    %1431 = vmatprep.subr.bf16.mxu0 0
    %1432 = vmatpush1.bf16.msra.mxu0 %v1066
    %1433 = vmatprep.subr.bf16.mxu0 0
    %1434 = vmatpush1.bf16.msra.mxu0 %v1065
    %1435 = vmatprep.subr.bf16.mxu0 0
    %1436 = vmatpush1.bf16.msra.mxu0 %v1064
    %1437 = vmatprep.subr.bf16.mxu0 0
    %1438 = vmatpush1.bf16.msra.mxu0 %v1063
    %1439 = vmatprep.subr.bf16.mxu0 0
    %1440 = vmatpush2.bf16.msra.mxu0 %v1078
    %1441 = vmatprep.subr.bf16.mxu0 0
    %1442 = vmatpush2.bf16.msra.mxu0 %v1077
    %1443 = vmatprep.subr.bf16.mxu0 0
    %1444 = vmatpush2.bf16.msra.mxu0 %v1076
    %1445 = vmatprep.subr.bf16.mxu0 0
    %1446 = vmatpush2.bf16.msra.mxu0 %v1075
    %1447 = vmatprep.subr.bf16.mxu0 0
    %1448 = vmatpush2.bf16.msra.mxu0 %v1074
    %1449 = vmatprep.subr.bf16.mxu0 0
    %1450 = vmatpush2.bf16.msra.mxu0 %v1073
    %1451 = vmatprep.subr.bf16.mxu0 0
    %1452 = vmatpush2.bf16.msra.mxu0 %v1072
    %1453 = vmatprep.subr.bf16.mxu0 0
    %1454 = vmatpush2.bf16.msra.mxu0 %v1071
    %1455 = vmatprep.mubr.bf16.mxu0 %v133
    %1456 = vmatmul.mubr.bf16.gmra.mxu0 %v132
    %v1457 = vpop.f32.mrf.mxu0
    %v1458 = vadd.f32 %v1418, %v1457
    %v1459 = vpop.f32.mrf.mxu0
    %v1460 = vpop.f32.mrf.mxu0
    %v1461 = vpop.f32.mrf.mxu0
    %1462 = vdwg.mxu0
    %1463 = vmatprep.subr.bf16.mxu0 0
    %1464 = vmatpush1.bf16.msra.mxu0 %v1086
    %1465 = vmatprep.subr.bf16.mxu0 0
    %1466 = vmatpush1.bf16.msra.mxu0 %v1085
    %1467 = vmatprep.subr.bf16.mxu0 0
    %1468 = vmatpush1.bf16.msra.mxu0 %v1084
    %1469 = vmatprep.subr.bf16.mxu0 0
    %1470 = vmatpush1.bf16.msra.mxu0 %v1083
    %1471 = vmatprep.subr.bf16.mxu0 0
    %1472 = vmatpush1.bf16.msra.mxu0 %v1082
    %1473 = vmatprep.subr.bf16.mxu0 0
    %1474 = vmatpush1.bf16.msra.mxu0 %v1081
    %1475 = vmatprep.subr.bf16.mxu0 0
    %1476 = vmatpush1.bf16.msra.mxu0 %v1080
    %1477 = vmatprep.subr.bf16.mxu0 0
    %1478 = vmatpush1.bf16.msra.mxu0 %v1079
    %1479 = vmatprep.subr.bf16.mxu0 0
    %1480 = vmatpush2.bf16.msra.mxu0 %v1094
    %1481 = vmatprep.subr.bf16.mxu0 0
    %1482 = vmatpush2.bf16.msra.mxu0 %v1093
    %1483 = vmatprep.subr.bf16.mxu0 0
    %1484 = vmatpush2.bf16.msra.mxu0 %v1092
    %1485 = vmatprep.subr.bf16.mxu0 0
    %1486 = vmatpush2.bf16.msra.mxu0 %v1091
    %1487 = vmatprep.subr.bf16.mxu0 0
    %1488 = vmatpush2.bf16.msra.mxu0 %v1090
    %1489 = vmatprep.subr.bf16.mxu0 0
    %1490 = vmatpush2.bf16.msra.mxu0 %v1089
    %1491 = vmatprep.subr.bf16.mxu0 0
    %1492 = vmatpush2.bf16.msra.mxu0 %v1088
    %1493 = vmatprep.subr.bf16.mxu0 0
    %1494 = vmatpush2.bf16.msra.mxu0 %v1087
    %1495 = vmatprep.mubr.bf16.mxu0 %v135
    %1496 = vmatmul.mubr.bf16.gmra.mxu0 %v134
    %v1497 = vpop.f32.mrf.mxu0
    %v1498 = vadd.f32 %v1458, %v1497
    %v1499 = vpop.f32.mrf.mxu0
    %v1500 = vpop.f32.mrf.mxu0
    %v1501 = vpop.f32.mrf.mxu0
    %1502 = vdwg.mxu0
    %1503 = vmatprep.subr.bf16.mxu0 0
    %1504 = vmatpush1.bf16.msra.mxu0 %v1102
    %1505 = vmatprep.subr.bf16.mxu0 0
    %1506 = vmatpush1.bf16.msra.mxu0 %v1101
    %1507 = vmatprep.subr.bf16.mxu0 0
    %1508 = vmatpush1.bf16.msra.mxu0 %v1100
    %1509 = vmatprep.subr.bf16.mxu0 0
    %1510 = vmatpush1.bf16.msra.mxu0 %v1099
    %1511 = vmatprep.subr.bf16.mxu0 0
    %1512 = vmatpush1.bf16.msra.mxu0 %v1098
    %1513 = vmatprep.subr.bf16.mxu0 0
    %1514 = vmatpush1.bf16.msra.mxu0 %v1097
    %1515 = vmatprep.subr.bf16.mxu0 0
    %1516 = vmatpush1.bf16.msra.mxu0 %v1096
    %1517 = vmatprep.subr.bf16.mxu0 0
    %1518 = vmatpush1.bf16.msra.mxu0 %v1095
    %1519 = vmatprep.subr.bf16.mxu0 0
    %1520 = vmatpush2.bf16.msra.mxu0 %v1110
    %1521 = vmatprep.subr.bf16.mxu0 0
    %1522 = vmatpush2.bf16.msra.mxu0 %v1109
    %1523 = vmatprep.subr.bf16.mxu0 0
    %1524 = vmatpush2.bf16.msra.mxu0 %v1108
    %1525 = vmatprep.subr.bf16.mxu0 0
    %1526 = vmatpush2.bf16.msra.mxu0 %v1107
    %1527 = vmatprep.subr.bf16.mxu0 0
    %1528 = vmatpush2.bf16.msra.mxu0 %v1106
    %1529 = vmatprep.subr.bf16.mxu0 0
    %1530 = vmatpush2.bf16.msra.mxu0 %v1105
    %1531 = vmatprep.subr.bf16.mxu0 0
    %1532 = vmatpush2.bf16.msra.mxu0 %v1104
    %1533 = vmatprep.subr.bf16.mxu0 0
    %1534 = vmatpush2.bf16.msra.mxu0 %v1103
    %1535 = vmatprep.mubr.bf16.mxu0 %v137
    %1536 = vmatmul.mubr.bf16.gmra.mxu0 %v136
    %v1537 = vpop.f32.mrf.mxu0
    %v1538 = vadd.f32 %v1498, %v1537
    %v1539 = vpop.f32.mrf.mxu0
    %v1540 = vpop.f32.mrf.mxu0
    %v1541 = vpop.f32.mrf.mxu0
    %1542 = vdwg.mxu0
    %1543 = vmatprep.subr.bf16.mxu0 0
    %1544 = vmatpush1.bf16.msra.mxu0 %v1118
    %1545 = vmatprep.subr.bf16.mxu0 0
    %1546 = vmatpush1.bf16.msra.mxu0 %v1117
    %1547 = vmatprep.subr.bf16.mxu0 0
    %1548 = vmatpush1.bf16.msra.mxu0 %v1116
    %1549 = vmatprep.subr.bf16.mxu0 0
    %1550 = vmatpush1.bf16.msra.mxu0 %v1115
    %1551 = vmatprep.subr.bf16.mxu0 0
    %1552 = vmatpush1.bf16.msra.mxu0 %v1114
    %1553 = vmatprep.subr.bf16.mxu0 0
    %1554 = vmatpush1.bf16.msra.mxu0 %v1113
    %1555 = vmatprep.subr.bf16.mxu0 0
    %1556 = vmatpush1.bf16.msra.mxu0 %v1112
    %1557 = vmatprep.subr.bf16.mxu0 0
    %1558 = vmatpush1.bf16.msra.mxu0 %v1111
    %1559 = vmatprep.subr.bf16.mxu0 0
    %1560 = vmatpush2.bf16.msra.mxu0 %v1126
    %1561 = vmatprep.subr.bf16.mxu0 0
    %1562 = vmatpush2.bf16.msra.mxu0 %v1125
    %1563 = vmatprep.subr.bf16.mxu0 0
    %1564 = vmatpush2.bf16.msra.mxu0 %v1124
    %1565 = vmatprep.subr.bf16.mxu0 0
    %1566 = vmatpush2.bf16.msra.mxu0 %v1123
    %1567 = vmatprep.subr.bf16.mxu0 0
    %1568 = vmatpush2.bf16.msra.mxu0 %v1122
    %1569 = vmatprep.subr.bf16.mxu0 0
    %1570 = vmatpush2.bf16.msra.mxu0 %v1121
    %1571 = vmatprep.subr.bf16.mxu0 0
    %1572 = vmatpush2.bf16.msra.mxu0 %v1120
    %1573 = vmatprep.subr.bf16.mxu0 0
    %1574 = vmatpush2.bf16.msra.mxu0 %v1119
    %1575 = vmatprep.mubr.bf16.mxu0 %v139
    %1576 = vmatmul.mubr.bf16.gmra.mxu0 %v138
    %v1577 = vpop.f32.mrf.mxu0
    %v1578 = vadd.f32 %v1538, %v1577
    %v1579 = vpop.f32.mrf.mxu0
    %v1580 = vpop.f32.mrf.mxu0
    %v1581 = vpop.f32.mrf.mxu0
    %1582 = vdwg.mxu0
    %1583 = vmatprep.subr.bf16.mxu0 0
    %1584 = vmatpush1.bf16.msra.mxu0 %v1134
    %1585 = vmatprep.subr.bf16.mxu0 0
    %1586 = vmatpush1.bf16.msra.mxu0 %v1133
    %1587 = vmatprep.subr.bf16.mxu0 0
    %1588 = vmatpush1.bf16.msra.mxu0 %v1132
    %1589 = vmatprep.subr.bf16.mxu0 0
    %1590 = vmatpush1.bf16.msra.mxu0 %v1131
    %1591 = vmatprep.subr.bf16.mxu0 0
    %1592 = vmatpush1.bf16.msra.mxu0 %v1130
    %1593 = vmatprep.subr.bf16.mxu0 0
    %1594 = vmatpush1.bf16.msra.mxu0 %v1129
    %1595 = vmatprep.subr.bf16.mxu0 0
    %1596 = vmatpush1.bf16.msra.mxu0 %v1128
    %1597 = vmatprep.subr.bf16.mxu0 0
    %1598 = vmatpush1.bf16.msra.mxu0 %v1127
    %1599 = vmatprep.subr.bf16.mxu0 0
    %1600 = vmatpush2.bf16.msra.mxu0 %v1142
    %1601 = vmatprep.subr.bf16.mxu0 0
    %1602 = vmatpush2.bf16.msra.mxu0 %v1141
    %1603 = vmatprep.subr.bf16.mxu0 0
    %1604 = vmatpush2.bf16.msra.mxu0 %v1140
    %1605 = vmatprep.subr.bf16.mxu0 0
    %1606 = vmatpush2.bf16.msra.mxu0 %v1139
    %1607 = vmatprep.subr.bf16.mxu0 0
    %1608 = vmatpush2.bf16.msra.mxu0 %v1138
    %1609 = vmatprep.subr.bf16.mxu0 0
    %1610 = vmatpush2.bf16.msra.mxu0 %v1137
    %1611 = vmatprep.subr.bf16.mxu0 0
    %1612 = vmatpush2.bf16.msra.mxu0 %v1136
    %1613 = vmatprep.subr.bf16.mxu0 0
    %1614 = vmatpush2.bf16.msra.mxu0 %v1135
    %1615 = vmatprep.mubr.bf16.mxu0 %v141
    %1616 = vmatmul.mubr.bf16.gmra.mxu0 %v140
    %v1617 = vpop.f32.mrf.mxu0
    %v1618 = vadd.f32 %v1578, %v1617
    %v1619 = vpop.f32.mrf.mxu0
    %v1620 = vpop.f32.mrf.mxu0
    %v1621 = vpop.f32.mrf.mxu0
    %1622 = vdwg.mxu0
    %1623 = vmatprep.subr.bf16.mxu0 0
    %1624 = vmatpush1.bf16.msra.mxu0 %v1150
    %1625 = vmatprep.subr.bf16.mxu0 0
    %1626 = vmatpush1.bf16.msra.mxu0 %v1149
    %1627 = vmatprep.subr.bf16.mxu0 0
    %1628 = vmatpush1.bf16.msra.mxu0 %v1148
    %1629 = vmatprep.subr.bf16.mxu0 0
    %1630 = vmatpush1.bf16.msra.mxu0 %v1147
    %1631 = vmatprep.subr.bf16.mxu0 0
    %1632 = vmatpush1.bf16.msra.mxu0 %v1146
    %1633 = vmatprep.subr.bf16.mxu0 0
    %1634 = vmatpush1.bf16.msra.mxu0 %v1145
    %1635 = vmatprep.subr.bf16.mxu0 0
    %1636 = vmatpush1.bf16.msra.mxu0 %v1144
    %1637 = vmatprep.subr.bf16.mxu0 0
    %1638 = vmatpush1.bf16.msra.mxu0 %v1143
    %1639 = vmatprep.subr.bf16.mxu0 0
    %1640 = vmatpush2.bf16.msra.mxu0 %v1158
    %1641 = vmatprep.subr.bf16.mxu0 0
    %1642 = vmatpush2.bf16.msra.mxu0 %v1157
    %1643 = vmatprep.subr.bf16.mxu0 0
    %1644 = vmatpush2.bf16.msra.mxu0 %v1156
    %1645 = vmatprep.subr.bf16.mxu0 0
    %1646 = vmatpush2.bf16.msra.mxu0 %v1155
    %1647 = vmatprep.subr.bf16.mxu0 0
    %1648 = vmatpush2.bf16.msra.mxu0 %v1154
    %1649 = vmatprep.subr.bf16.mxu0 0
    %1650 = vmatpush2.bf16.msra.mxu0 %v1153
    %1651 = vmatprep.subr.bf16.mxu0 0
    %1652 = vmatpush2.bf16.msra.mxu0 %v1152
    %1653 = vmatprep.subr.bf16.mxu0 0
    %1654 = vmatpush2.bf16.msra.mxu0 %v1151
    %1655 = vmatprep.mubr.bf16.mxu0 %v143
    %1656 = vmatmul.mubr.bf16.gmra.mxu0 %v142
    %v1657 = vpop.f32.mrf.mxu0
    %v1658 = vadd.f32 %v1618, %v1657
    %v1659 = vpop.f32.mrf.mxu0
    %v1660 = vpop.f32.mrf.mxu0
    %v1661 = vpop.f32.mrf.mxu0
    %1662 = vdwg.mxu0
    %v1663 = vpack.c.bf16 %v1658, %v1658
    %v1664 = vld [vmem:[%s3] sm:$0xf]
    %v1665 = vld [vmem:[%s3 + $0x4] sm:$0xf]
    %v1666 = vld [vmem:[%s3 + $0x8] sm:$0xf]
    %v1667 = vld [vmem:[%s3 + $0xc] sm:$0xf]
    %v1668 = vld [vmem:[%s3 + $0x10] sm:$0xf]
    %v1669 = vld [vmem:[%s3 + $0x14] sm:$0xf]
    %v1670 = vld [vmem:[%s3 + $0x18] sm:$0xf]
    %v1671 = vld [vmem:[%s3 + $0x1c] sm:$0xf]
    %v1672 = vld [vmem:[%s3 + $0x20] sm:$0xf]
    %v1673 = vld [vmem:[%s3 + $0x24] sm:$0xf]
    %v1674 = vld [vmem:[%s3 + $0x28] sm:$0xf]
    %v1675 = vld [vmem:[%s3 + $0x2c] sm:$0xf]
    %v1676 = vld [vmem:[%s3 + $0x30] sm:$0xf]
    %v1677 = vld [vmem:[%s3 + $0x34] sm:$0xf]
    %v1678 = vld [vmem:[%s3 + $0x38] sm:$0xf]
    %v1679 = vld [vmem:[%s3 + $0x3c] sm:$0xf]
    %v1680 = vld [vmem:[%s4] sm:$0x1]
    %v1682 = vlaneseq
    %v1683 = vshrl.u32 %v1682, 7
    %v1684 = vsub.s32 0, %v1683
    %v1685 = vrot.slane %v1680, %v1684
    %v1703 = vunpack.c.l.b16 %v1664
    %v1704 = vunpack.c.l.b16 %v1665
    %v1705 = vunpack.c.l.b16 %v1666
    %v1706 = vunpack.c.l.b16 %v1667
    %v1707 = vunpack.c.l.b16 %v1668
    %v1708 = vunpack.c.l.b16 %v1669
    %v1709 = vunpack.c.l.b16 %v1670
    %v1710 = vunpack.c.l.b16 %v1671
    %v1711 = vunpack.c.l.b16 %v1672
    %v1712 = vunpack.c.l.b16 %v1673
    %v1713 = vunpack.c.l.b16 %v1674
    %v1714 = vunpack.c.l.b16 %v1675
    %v1715 = vunpack.c.l.b16 %v1676
    %v1716 = vunpack.c.l.b16 %v1677
    %v1717 = vunpack.c.l.b16 %v1678
    %v1718 = vunpack.c.l.b16 %v1679
    %v1719 = vpack.c.b16 %v1704, %v1703
    %v1720 = vpack.c.b16 %v1706, %v1705
    %v1721 = vpack.c.b16 %v1708, %v1707
    %v1722 = vpack.c.b16 %v1710, %v1709
    %v1723 = vpack.c.b16 %v1712, %v1711
    %v1724 = vpack.c.b16 %v1714, %v1713
    %v1725 = vpack.c.b16 %v1716, %v1715
    %v1726 = vpack.c.b16 %v1718, %v1717
    %1735 = vmatprep.subr.bf16.mxu0 0
    %1736 = vmatpush1.bf16.msra.mxu0 %v1726
    %1737 = vmatprep.subr.bf16.mxu0 0
    %1738 = vmatpush1.bf16.msra.mxu0 %v1725
    %1739 = vmatprep.subr.bf16.mxu0 0
    %1740 = vmatpush1.bf16.msra.mxu0 %v1724
    %1741 = vmatprep.subr.bf16.mxu0 0
    %1742 = vmatpush1.bf16.msra.mxu0 %v1723
    %1743 = vmatprep.subr.bf16.mxu0 0
    %1744 = vmatpush1.bf16.msra.mxu0 %v1722
    %1745 = vmatprep.subr.bf16.mxu0 0
    %1746 = vmatpush1.bf16.msra.mxu0 %v1721
    %1747 = vmatprep.subr.bf16.mxu0 0
    %1748 = vmatpush1.bf16.msra.mxu0 %v1720
    %1749 = vmatprep.subr.bf16.mxu0 0
    %1750 = vmatpush1.bf16.msra.mxu0 %v1719
    %1751 = vmatprep.subr.bf16.mxu0 0
    %1752 = vmatpush2.bf16.msra.mxu0 0
    %1753 = vmatprep.subr.bf16.mxu0 0
    %1754 = vmatpush2.bf16.msra.mxu0 0
    %1755 = vmatprep.subr.bf16.mxu0 0
    %1756 = vmatpush2.bf16.msra.mxu0 0
    %1757 = vmatprep.subr.bf16.mxu0 0
    %1758 = vmatpush2.bf16.msra.mxu0 0
    %1759 = vmatprep.subr.bf16.mxu0 0
    %1760 = vmatpush2.bf16.msra.mxu0 0
    %1761 = vmatprep.subr.bf16.mxu0 0
    %1762 = vmatpush2.bf16.msra.mxu0 0
    %1763 = vmatprep.subr.bf16.mxu0 0
    %1764 = vmatpush2.bf16.msra.mxu0 0
    %1765 = vmatprep.subr.bf16.mxu0 0
    %1766 = vmatpush2.bf16.msra.mxu0 0
    %1767 = vmatprep.mubr.bf16.mxu0 0
    %1768 = vmatmul.mubr.bf16.gmra.mxu0 %v1663
    %v1769 = vpop.f32.mrf.mxu0
    %v1770 = vadd.f32 %v1685, %v1769
    %v1771 = vpop.f32.mrf.mxu0
    %v1772 = vpop.f32.mrf.mxu0
    %v1773 = vpop.f32.mrf.mxu0
    %1774 = vdwg.mxu0
    %vm1775 = vcmask 1041408
    %v1776 = vsel %vm1775, %v1770, -inf
    %1777 = vmax.xlane.f32.xlu0 %v1776
    %v1778 = vpop.xlane.xlu0 %1777
    %v1779 = vsub.f32 %v1770, %v1778
    %v1780 = vmul.f32 %v1779, 1.442695
    %v1781 = vpow.pop %v1780
    %v1782 = vsel %vm1775, %v1781, 0.0
    %1783 = vadd.xlane.f32.xlu0 %v1782
    %v1784 = vpop.xlane.xlu0 %1783
    %v1785 = vrcp.pop %v1784
    %v1786 = vmul.f32 %v1781, %v1785
    %1787 = vst [vmem:[#allocation2] sm:$0x3] %v1786
    // Predicated region
    $region22: #{simple_fc_forward.1} parent=1 // pred_check
      _
    $region23: #{simple_fc_forward.1} parent=1 // pred_check_branch
      %1789 = sbr.rel (0) target = $region25
    $region24: #{simple_fc_forward.1} parent=1 // pred_region
      %s1791 = ssub.s32 32, 32
      %1792 = vsyncadd [#allocation3], %s1791
      %s1794 = sshll.u32 [#allocation2], 4
      %s1795 = int_to_ptr.vmem [resolvable:$true] %s1794
      %1797 = dma.vmem_to_hbm [thread:$0]  %s1795, 32, %s5, [#allocation3]
    $region25: #{simple_fc_forward.1} parent=1 // pred_fallthru
      _
    // Predicated region
    $region26: #{simple_fc_forward.1} parent=1 // pred_check
      _
    $region27: #{simple_fc_forward.1} parent=1 // pred_check_branch
      %1799 = sbr.rel (0) target = $region29
    $region28: #{simple_fc_forward.1} parent=1 // pred_region
      %1800 = dma.done [#allocation3], 32
    $region29: #{simple_fc_forward.1} parent=1 // pred_fallthru
      _
    %1801 = vsyncpa [#allocation3], 1

</llo_original>
